<compile_context>
chip_gen: v6e
topology: v6e:2x2x1
jax: 0.10.0
libtpu: 0.0.40
codegen_flags: <defaults>
</compile_context>

<pallas_src>
import functools

import jax
import jax.numpy as jnp
from jax import lax
from jax.experimental import pallas as pl
from jax.experimental.pallas import tpu as pltpu

C_OUT = 20
KH = KW = 3
K_TAPS = KH * KW          # 9 conv taps
K_PAD = 16                # taps padded to two full sublane tiles for the MXU


def _round_up(x, m):
    return (x + m - 1) // m * m


def _residual_conv_kernel(xe_ref, w_ref, b_ref, o_ref, *, WS, PAD0, OUT_L):
    # xe_ref: (1, 1, LROW)  one image's flattened plane; rows strided by WS
    #                       (last column zero), >= WS+1 zero halo on both ends.
    # w_ref:  (C_OUT, K_PAD) conv weights, (kh, kw) row-major, cols 9..15 zero.
    # b_ref:  (C_OUT, 1)     bias.
    # o_ref:  (1, C_OUT, OUT_L) output tile (lane-dense, OUT_L % 128 == 0).
    xe = xe_ref[0]                                   # (1, LROW)

    # 9 shifted taps: tap(dh,dw)[p] == x[h+dh, w+dw] for p = h*WS + w.
    # Out-of-image reads hit the zero pad column / halo, so no masks needed.
    rows = []
    for dh in (-1, 0, 1):
        for dw in (-1, 0, 1):
            off = PAD0 + dh * WS + dw
            rows.append(xe[:, off:off + OUT_L])      # (1, OUT_L) static slice
    center = rows[K_TAPS // 2]                       # == x; reused as residual
    rows += [center] * (K_PAD - K_TAPS)              # pad rows (weights are 0)
    taps = jnp.concatenate(rows, axis=0)             # (K_PAD, OUT_L)

    # (20, 16) @ (16, OUT_L) contraction on the MXU.
    conv = jnp.dot(w_ref[...], taps, preferred_element_type=jnp.float32)

    # bias + ReLU + residual (channel-broadcast of x) on the VPU, then one
    # dense lane-aligned store of the whole (C_OUT, OUT_L) tile.
    y = jnp.maximum(conv + b_ref[...], 0.0) + center
    o_ref[0, :, :] = y.astype(o_ref.dtype)


def residual_block_pallas(x_nchw, weight, bias):
    """x_nchw: (N, 1, H, W) f32; weight: (20, 1, 3, 3); bias: (20,).
    Returns (N, 20, H, W) f32 == x + relu(conv2d_same(x)), matching
    PyTorch ResidualBlock(conv_transpose=False, activation=ReLU)."""
    N, Cin, H, W = x_nchw.shape
    assert Cin == 1 and W >= 2
    WS = W + 1                        # row stride: one zero pad column per row
    PAD0 = WS + 1                     # leading halo (covers dh=-1 of row 0)
    OUT_L = _round_up(H * WS, 128)    # lane-dense output width (>= H*WS)
    LROW = _round_up(PAD0 + OUT_L + WS + 1, 128)

    # Per-image padded flat plane: (N, 1, LROW) with zero pad column + halos.
    xp = jnp.pad(x_nchw.reshape(N, H, W), ((0, 0), (0, 0), (0, WS - W)))
    xflat = xp.reshape(N, H * WS)
    xe = jnp.pad(xflat, ((0, 0), (PAD0, LROW - PAD0 - H * WS)))
    xe = xe.reshape(N, 1, LROW)

    # Weights: (20,1,3,3) -> (20,9) row-major over (kh,kw) -> zero-pad K to 16.
    w_pad = jnp.pad(weight.reshape(C_OUT, K_TAPS),
                    ((0, 0), (0, K_PAD - K_TAPS)))
    b_col = bias.reshape(C_OUT, 1)

    kernel = functools.partial(_residual_conv_kernel,
                               WS=WS, PAD0=PAD0, OUT_L=OUT_L)

    flops = N * (2 * C_OUT * K_PAD * OUT_L + 3 * C_OUT * OUT_L)
    bytes_accessed = 4 * (N * LROW + C_OUT * K_PAD + C_OUT + N * C_OUT * OUT_L)

    out = pl.pallas_call(
        kernel,
        out_shape=jax.ShapeDtypeStruct((N, C_OUT, OUT_L), jnp.float32),
        grid=(N,),                                    # one image per grid step
        in_specs=[
            pl.BlockSpec((1, 1, LROW), lambda n: (n, 0, 0)),
            pl.BlockSpec((C_OUT, K_PAD), lambda n: (0, 0)),
            pl.BlockSpec((C_OUT, 1), lambda n: (0, 0)),
        ],
        out_specs=pl.BlockSpec((1, C_OUT, OUT_L), lambda n: (n, 0, 0)),
        compiler_params=pltpu.CompilerParams(
            # independent per-image work: shard across v7x TensorCores and
            # pipeline the 20x output write-back against compute.
            dimension_semantics=("parallel",)),
        cost_estimate=pl.CostEstimate(
            flops=flops, transcendentals=0, bytes_accessed=bytes_accessed),
    )(xe, w_pad, b_col)

    # Crop lane padding and the per-row zero column: (N,20,OUT_L) -> (N,20,H,W).
    out = out[:, :, :H * WS].reshape(N, C_OUT, H, WS)[:, :, :, :W]
    return out


def _reference(x_nchw, weight, bias):
    """Pure-JAX reference of the PyTorch forward, for validation."""
    x_nhwc = jnp.transpose(x_nchw, (0, 2, 3, 1))                 # (N, H, W, 1)
    k_hwio = jnp.transpose(weight, (2, 3, 1, 0))                 # (3, 3, 1, 20)
    conv = lax.conv_general_dilated(
        x_nhwc, k_hwio, window_strides=(1, 1), padding="SAME",
        dimension_numbers=("NHWC", "HWIO", "NHWC"))
    act = jnp.maximum(conv + bias.reshape(1, 1, 1, C_OUT), 0.0)
    out = x_nhwc + act                                           # broadcast C
    return jnp.transpose(out, (0, 3, 1, 2))                      # NCHW


if __name__ == "__main__":
    key = jax.random.PRNGKey(0)
    kx, kw, kb = jax.random.split(key, 3)

    N, H, W = 2, 16, 16
    x = jax.random.normal(kx, (N, 1, H, W), dtype=jnp.float32)

    # deterministic synthetic parameters (Conv2d(1, 20, 3x3) shapes)
    fan_in = 1 * KH * KW
    bound = 1.0 / (fan_in ** 0.5)
    weight = jax.random.uniform(kw, (C_OUT, 1, KH, KW),
                                minval=-bound, maxval=bound, dtype=jnp.float32)
    bias = jax.random.uniform(kb, (C_OUT,),
                              minval=-bound, maxval=bound, dtype=jnp.float32)

    out = jax.block_until_ready(residual_block_pallas(x, weight, bias))

    ref = _reference(x, weight, bias)
    assert out.shape == (N, C_OUT, H, W)
    assert jnp.allclose(out, ref, atol=1e-5, rtol=1e-5)

    print("KERNEL_OK")
</pallas_src>

<mosaic_0001>
module attributes {stable_mosaic.version = 11 : i64} {
  func.func @_residual_conv_kernel(%arg0: i32, %arg1: memref<1x1x512xf32, #tpu.memory_space<vmem>>, %arg2: memref<20x16xf32, #tpu.memory_space<vmem>>, %arg3: memref<20x1xf32, #tpu.memory_space<vmem>>, %arg4: memref<1x20x384xf32, #tpu.memory_space<vmem>>) attributes {dimension_semantics = [#tpu.dimension_semantics<parallel>], iteration_bounds = array<i64: 2>, scalar_prefetch = 0 : i64, scratch_operands = 0 : i64, tpu.core_type = #tpu.core_type<tc>, window_params = [{transform_indices = @transform_0, window_bounds = array<i64: 1, 1, 512>}, {pipeline_mode = #tpu.pipeline_mode<synchronous>, transform_indices = @transform_1, window_bounds = array<i64: 20, 16>}, {pipeline_mode = #tpu.pipeline_mode<synchronous>, transform_indices = @transform_2, window_bounds = array<i64: 20, 1>}, {transform_indices = @transform_3, window_bounds = array<i64: 1, 20, 384>}]} {
    %c0 = arith.constant 0 : index
    %c0_0 = arith.constant 0 : index
    %c0_1 = arith.constant 0 : index
    %0 = vector.load %arg1[%c0, %c0_0, %c0_1] : memref<1x1x512xf32, #tpu.memory_space<vmem>>, vector<1x1x512xf32>
    %1 = vector.shape_cast %0 : vector<1x1x512xf32> to vector<1x512xf32>
    %2 = vector.extract_strided_slice %1 {offsets = [0, 0], sizes = [1, 384], strides = [1, 1]} : vector<1x512xf32> to vector<1x384xf32>
    %3 = vector.extract_strided_slice %1 {offsets = [0, 1], sizes = [1, 384], strides = [1, 1]} : vector<1x512xf32> to vector<1x384xf32>
    %4 = vector.extract_strided_slice %1 {offsets = [0, 2], sizes = [1, 384], strides = [1, 1]} : vector<1x512xf32> to vector<1x384xf32>
    %5 = vector.extract_strided_slice %1 {offsets = [0, 17], sizes = [1, 384], strides = [1, 1]} : vector<1x512xf32> to vector<1x384xf32>
    %6 = vector.extract_strided_slice %1 {offsets = [0, 18], sizes = [1, 384], strides = [1, 1]} : vector<1x512xf32> to vector<1x384xf32>
    %7 = vector.extract_strided_slice %1 {offsets = [0, 19], sizes = [1, 384], strides = [1, 1]} : vector<1x512xf32> to vector<1x384xf32>
    %8 = vector.extract_strided_slice %1 {offsets = [0, 34], sizes = [1, 384], strides = [1, 1]} : vector<1x512xf32> to vector<1x384xf32>
    %9 = vector.extract_strided_slice %1 {offsets = [0, 35], sizes = [1, 384], strides = [1, 1]} : vector<1x512xf32> to vector<1x384xf32>
    %10 = vector.extract_strided_slice %1 {offsets = [0, 36], sizes = [1, 384], strides = [1, 1]} : vector<1x512xf32> to vector<1x384xf32>
    %11 = tpu.concatenate %2, %3, %4, %5, %6, %7, %8, %9, %10, %6, %6, %6, %6, %6, %6, %6 in 0 : vector<1x384xf32>, vector<1x384xf32>, vector<1x384xf32>, vector<1x384xf32>, vector<1x384xf32>, vector<1x384xf32>, vector<1x384xf32>, vector<1x384xf32>, vector<1x384xf32>, vector<1x384xf32>, vector<1x384xf32>, vector<1x384xf32>, vector<1x384xf32>, vector<1x384xf32>, vector<1x384xf32>, vector<1x384xf32> -> vector<16x384xf32>
    %c0_2 = arith.constant 0 : index
    %c0_3 = arith.constant 0 : index
    %12 = vector.load %arg2[%c0_2, %c0_3] : memref<20x16xf32, #tpu.memory_space<vmem>>, vector<20x16xf32>
    %cst = arith.constant dense<0.000000e+00> : vector<20x384xf32>
    %13 = tpu.matmul %12, %11, %cst {dimension_numbers = #tpu.dot_dimension_numbers<[1], [0], [0], [1], [0, 0, 1, 1], [], []>} : vector<20x16xf32>, vector<16x384xf32>, vector<20x384xf32> -> vector<20x384xf32>
    %c0_4 = arith.constant 0 : index
    %c0_5 = arith.constant 0 : index
    %14 = vector.load %arg3[%c0_4, %c0_5] : memref<20x1xf32, #tpu.memory_space<vmem>>, vector<20x1xf32>
    %15 = vector.broadcast %14 : vector<20x1xf32> to vector<20x384xf32>
    %16 = arith.addf %13, %15 : vector<20x384xf32>
    %cst_6 = arith.constant 0.000000e+00 : f32
    %17 = vector.broadcast %cst_6 : f32 to vector<20x384xf32>
    %18 = arith.maximumf %16, %17 : vector<20x384xf32>
    %19 = vector.broadcast %6 : vector<1x384xf32> to vector<20x384xf32>
    %20 = arith.addf %18, %19 : vector<20x384xf32>
    %c0_7 = arith.constant 0 : index
    %c0_8 = arith.constant 0 : index
    %c0_9 = arith.constant 0 : index
    %21 = vector.load %arg4[%c0_7, %c0_8, %c0_9] : memref<1x20x384xf32, #tpu.memory_space<vmem>>, vector<1x20x384xf32>
    %22 = vector.shape_cast %21 : vector<1x20x384xf32> to vector<20x384xf32>
    %23 = vector.shape_cast %20 : vector<20x384xf32> to vector<1x20x384xf32>
    tpu.vector_store %arg4[%c0_7, %c0_8, %c0_9], %23 {strides = array<i32>} : memref<1x20x384xf32, #tpu.memory_space<vmem>>, vector<1x20x384xf32>,
    return
  }
  func.func @transform_0(%arg0: i32) -> (i32, i32, i32) {
    %c0_i32 = arith.constant 0 : i32
    %c0_i32_0 = arith.constant 0 : i32
    %c0_i32_1 = arith.constant 0 : i32
    return %arg0, %c0_i32, %c0_i32_0 : i32, i32, i32
  }
  func.func @transform_1(%arg0: i32) -> (i32, i32) {
    %c0_i32 = arith.constant 0 : i32
    %c0_i32_0 = arith.constant 0 : i32
    %c0_i32_1 = arith.constant 0 : i32
    return %c0_i32, %c0_i32_0 : i32, i32
  }
  func.func @transform_2(%arg0: i32) -> (i32, i32) {
    %c0_i32 = arith.constant 0 : i32
    %c0_i32_0 = arith.constant 0 : i32
    %c0_i32_1 = arith.constant 0 : i32
    return %c0_i32, %c0_i32_0 : i32, i32
  }
  func.func @transform_3(%arg0: i32) -> (i32, i32, i32) {
    %c0_i32 = arith.constant 0 : i32
    %c0_i32_0 = arith.constant 0 : i32
    %c0_i32_1 = arith.constant 0 : i32
    return %arg0, %c0_i32, %c0_i32_0 : i32, i32, i32
  }
}

</mosaic_0001>

<llo_original>
// kernel: tpu_custom_call.1
$region0: #{tpu_custom_call.1}
  #allocation0 [shape = 'u32[]', space=smem, size = 0x4, offset = 0x4, fixed_abs, tag = 'smem constant byte address 0x4 - core index']
  #allocation1 [shape = 'u32[144,128]{1,0:T(1,128)}', space=vmem, size = 0x12000, scoped, tag = 'internal scratch']
  %s0 = inlined_call_operand.vmem [shape: f32[2,1,512], index: 0, kind: input, shape index: {}]
  %s1 = inlined_call_operand.vmem [shape: f32[20,16], index: 1, kind: input, shape index: {}]
  %s2 = inlined_call_operand.vmem [shape: f32[20,1], index: 2, kind: input, shape index: {}]
  %s3 = inlined_call_operand.vmem [shape: f32[2,20,384], index: 3, kind: output, shape index: {}]
  %s4 = sld [smem:[#allocation0]]
  $region45: #{tpu_custom_call.1} parent=0
    _
  %s6 = ssub.s32 1, %s4
  %s7 = scalar_select 0, %s6, %s4
  loop: start=0, step=1, limit=4
  $region2: #{tpu_custom_call.1} parent=0 // loop_pre_header
    _
  $region3: #{tpu_custom_call.1} parent=0 // loop_header
    %s9 = sphi 0, %s13
    %p10 = scmp.ge.s32.totalorder %s9, 4
    %s19 = sphi 0, %s21
    %s22 = sphi 0, %s19
    %s23 = sphi 0, %s22
    %s39 = sphi 0, %s23
    %s43 = sphi 0, %s43
    %s45 = sphi 0, %s43
    %s46 = sphi 0, %s45
    %s60 = sphi 0, %s46
    %s64 = sphi 0, %s64
    %s66 = sphi 0, %s64
    %s67 = sphi 0, %s66
    %s81 = sphi 0, %s67
    %s87 = sphi 0, %s89
    %s90 = sphi 0, %s87
    %s91 = sphi 0, %s90
    %s107 = sphi 0, %s91
  $region4: #{tpu_custom_call.1} parent=0 // loop_header_branch
    %12 = sbr.rel (%p10) target = $region8
  $region5: #{tpu_custom_call.1} parent=0 // loop_body
    %s14 = ssub.s32 %s9, 1
    %s15 = ssub.s32 %s9, 2
    %s16 = sadd.s32 %s9, 1
    %s17 = ssub.s32 %s9, %s16
    %p18 = scmp.eq.s32.totalorder %s17, 0
    %s20 = sadd.s32 %s19, 1
    %s21 = scalar_select %p18, %s19, %s20
    %p24 = pneg %p18
    %p25 = scmp.eq.s32.totalorder %s9, 1
    %p26 = por %p24, %p25
    %p27 = scmp.ne.s32.totalorder %s19, %s22
    %p28 = scmp.eq.s32.totalorder %s9, 0
    %p29 = por %p27, %p28
    %p30 = scmp.ne.s32.totalorder %s19, %s22
    %p31 = scmp.eq.s32.totalorder %s14, 1
    %p32 = por %p30, %p31
    %p33 = scmp.ne.s32.totalorder %s22, %s23
    %p34 = scmp.eq.s32.totalorder %s14, 0
    %p35 = por %p33, %p34
    %p36 = scmp.ne.s32.totalorder %s22, %s23
    %p37 = scmp.eq.s32.totalorder %s15, 1
    %p38 = por %p36, %p37
    %p40 = scmp.ne.s32.totalorder %s23, %s39
    %p41 = scmp.eq.s32.totalorder %s15, 0
    %p42 = por %p40, %p41
    %s44 = sadd.s32 %s43, 1
    %p47 = scmp.eq.s32.totalorder %s9, 1
    %p48 = scmp.ne.s32.totalorder %s43, %s45
    %p49 = scmp.eq.s32.totalorder %s9, 0
    %p50 = por %p48, %p49
    %p51 = scmp.ne.s32.totalorder %s43, %s45
    %p52 = scmp.eq.s32.totalorder %s14, 1
    %p53 = por %p51, %p52
    %p54 = scmp.ne.s32.totalorder %s45, %s46
    %p55 = scmp.eq.s32.totalorder %s14, 0
    %p56 = por %p54, %p55
    %p57 = scmp.ne.s32.totalorder %s45, %s46
    %p58 = scmp.eq.s32.totalorder %s15, 1
    %p59 = por %p57, %p58
    %p61 = scmp.ne.s32.totalorder %s46, %s60
    %p62 = scmp.eq.s32.totalorder %s15, 0
    %p63 = por %p61, %p62
    %s65 = sadd.s32 %s64, 1
    %p68 = scmp.eq.s32.totalorder %s9, 1
    %p69 = scmp.ne.s32.totalorder %s64, %s66
    %p70 = scmp.eq.s32.totalorder %s9, 0
    %p71 = por %p69, %p70
    %p72 = scmp.ne.s32.totalorder %s64, %s66
    %p73 = scmp.eq.s32.totalorder %s14, 1
    %p74 = por %p72, %p73
    %p75 = scmp.ne.s32.totalorder %s66, %s67
    %p76 = scmp.eq.s32.totalorder %s14, 0
    %p77 = por %p75, %p76
    %p78 = scmp.ne.s32.totalorder %s66, %s67
    %p79 = scmp.eq.s32.totalorder %s15, 1
    %p80 = por %p78, %p79
    %p82 = scmp.ne.s32.totalorder %s67, %s81
    %p83 = scmp.eq.s32.totalorder %s15, 0
    %p84 = por %p82, %p83
    %s85 = ssub.s32 %s9, %s16
    %p86 = scmp.eq.s32.totalorder %s85, 0
    %s88 = sadd.s32 %s87, 1
    %s89 = scalar_select %p86, %s87, %s88
    %p92 = pneg %p86
    %p93 = scmp.eq.s32.totalorder %s9, 1
    %p94 = por %p92, %p93
    %p95 = scmp.ne.s32.totalorder %s87, %s90
    %p96 = scmp.eq.s32.totalorder %s9, 0
    %p97 = por %p95, %p96
    %p98 = scmp.ne.s32.totalorder %s87, %s90
    %p99 = scmp.eq.s32.totalorder %s14, 1
    %p100 = por %p98, %p99
    %p101 = scmp.ne.s32.totalorder %s90, %s91
    %p102 = scmp.eq.s32.totalorder %s14, 0
    %p103 = por %p101, %p102
    %p104 = scmp.ne.s32.totalorder %s90, %s91
    %p105 = scmp.eq.s32.totalorder %s15, 1
    %p106 = por %p104, %p105
    %p108 = scmp.ne.s32.totalorder %s91, %s107
    %p109 = scmp.eq.s32.totalorder %s15, 0
    %p110 = por %p108, %p109
    %p111 = scmp.le.s32.totalorder 1, %s9
    %p112 = scmp.lt.s32.totalorder %s9, 3
    %p113 = pnand %p111, %p112
    %p114 = pneg %p113
    // Predicated region
    $region9: #{tpu_custom_call.1} parent=5 // pred_check
      _
    $region10: #{tpu_custom_call.1} parent=5 // pred_check_branch
      %116 = sbr.rel (%p113) target = $region12
    $region11: #{tpu_custom_call.1} parent=5 // pred_region
      %s117 = ssub.s32 %s9, 1
      // Predicated region
      $region13: #{tpu_custom_call.1} parent=11 // pred_check
        %p118 = pneg %p56
      $region14: #{tpu_custom_call.1} parent=11 // pred_check_branch
        %120 = sbr.rel (%p118) target = $region16
      $region15: #{tpu_custom_call.1} parent=11 // pred_region
        _
      $region16: #{tpu_custom_call.1} parent=11 // pred_fallthru
        _
      // Predicated region
      $region17: #{tpu_custom_call.1} parent=11 // pred_check
        %p121 = pneg %p77
      $region18: #{tpu_custom_call.1} parent=11 // pred_check_branch
        %123 = sbr.rel (%p121) target = $region20
      $region19: #{tpu_custom_call.1} parent=11 // pred_region
        _
      $region20: #{tpu_custom_call.1} parent=11 // pred_fallthru
        _
    $region12: #{tpu_custom_call.1} parent=5 // pred_fallthru
      _
    %p124 = scmp.lt.s32.totalorder %s9, 2
    // Predicated region
    $region21: #{tpu_custom_call.1} parent=5 // pred_check
      %p125 = pneg %p124
    $region22: #{tpu_custom_call.1} parent=5 // pred_check_branch
      %127 = sbr.rel (%p125) target = $region24
    $region23: #{tpu_custom_call.1} parent=5 // pred_region
      // Predicated region
      $region25: #{tpu_custom_call.1} parent=23 // pred_check
        %p128 = pneg %p29
      $region26: #{tpu_custom_call.1} parent=23 // pred_check_branch
        %130 = sbr.rel (%p128) target = $region28
      $region27: #{tpu_custom_call.1} parent=23 // pred_region
        %p131 = scmp.lt.s32.totalorder %s9, 1
        %s132 = scalar_select %p131, %s9, 1
        %s133 = smul.addr %s132, 4
        %s134 = scalar_lea.vmem %s0, %s133
      $region28: #{tpu_custom_call.1} parent=23 // pred_fallthru
        _
    $region24: #{tpu_custom_call.1} parent=5 // pred_fallthru
      _
    %p135 = scmp.le.s32.totalorder 1, %s9
    %p136 = scmp.lt.s32.totalorder %s9, 3
    %p137 = pnand %p135, %p136
    %p138 = pneg %p137
    // Predicated region
    $region29: #{tpu_custom_call.1} parent=5 // pred_check
      _
    $region30: #{tpu_custom_call.1} parent=5 // pred_check_branch
      %140 = sbr.rel (%p137) target = $region32
    $region31: #{tpu_custom_call.1} parent=5 // pred_region
      %s141 = ssub.s32 %s9, 1
      %p142 = scmp.lt.s32.totalorder %s14, 1
      %s143 = scalar_select %p142, %s14, 1
      %s144 = smul.addr %s143, 4
      %s145 = scalar_lea.vmem %s0, %s144
      %p146 = pneg %p35
      %p147 = pneg %p32
      %p148 = pneg %p56
      %p149 = pneg %p53
      %p150 = pneg %p77
      %p151 = pneg %p74
      %p152 = pneg %p103
      %p153 = pneg %p100
      %p154 = scmp.lt.s32.totalorder %s14, 1
      %s155 = scalar_select %p154, %s14, 1
      %s156 = smul.addr %s155, 9
      %s157 = smul.addr %s156, 8
      %s158 = scalar_lea.vmem %s3, %s157
      %p159 = scmp.lt.s32.totalorder %s14, 1
      %s160 = scalar_select %p159, %s14, 1
      %s161 = smul.addr %s160, 4
      %s162 = scalar_lea.vmem %s0, %s161
      %p163 = scmp.lt.s32.totalorder %s14, 1
      %s164 = scalar_select %p163, %s14, 1
      %s165 = smul.addr %s164, 9
      %s166 = smul.addr %s165, 8
      %s167 = scalar_lea.vmem %s3, %s166
      %v168 = vld [vmem:[%s162] sm:$0xf]
      %v170 = vlaneseq
      %v171 = vshrl.u32 %v170, 7
      %v172 = vsub.s32 0, %v171
      %v173 = vrot.slane %v168, %v172
      %v174 = vlaneseq
      %v175 = vshrl.u32 %v174, 7
      %v176 = vsub.s32 1, %v175
      %v177 = vrot.slane %v168, %v176
      %v178 = vlaneseq
      %v179 = vshrl.u32 %v178, 7
      %v180 = vsub.s32 2, %v179
      %v181 = vrot.slane %v168, %v180
      %v185 = vlaneseq
      %v186 = vshrl.u32 %v185, 7
      %v187 = vsub.s32 3, %v186
      %v188 = vrot.slane %v168, %v187
      %189 = vrot.lane.b32.xlu0 %v173, 127
      %v190 = vpop.permute.xlu0 %189
      %191 = vrot.lane.b32.xlu0 %v177, 127
      %v192 = vpop.permute.xlu0 %191
      %193 = vrot.lane.b32.xlu0 %v181, 127
      %v194 = vpop.permute.xlu0 %193
      %195 = vrot.lane.b32.xlu0 %v188, 127
      %v196 = vpop.permute.xlu0 %195
      %vm197 = vcmask 1039360
      %v198 = vsel %vm197, %v190, %v192
      %v199 = vsel %vm197, %v192, %v194
      %v200 = vsel %vm197, %v194, %v196
      %204 = vrot.lane.b32.xlu0 %v173, 126
      %v205 = vpop.permute.xlu0 %204
      %206 = vrot.lane.b32.xlu0 %v177, 126
      %v207 = vpop.permute.xlu0 %206
      %208 = vrot.lane.b32.xlu0 %v181, 126
      %v209 = vpop.permute.xlu0 %208
      %210 = vrot.lane.b32.xlu0 %v188, 126
      %v211 = vpop.permute.xlu0 %210
      %vm212 = vcmask 1031168
      %v213 = vsel %vm212, %v205, %v207
      %v214 = vsel %vm212, %v207, %v209
      %v215 = vsel %vm212, %v209, %v211
      %219 = vrot.lane.b32.xlu0 %v173, 111
      %v220 = vpop.permute.xlu0 %219
      %221 = vrot.lane.b32.xlu0 %v177, 111
      %v222 = vpop.permute.xlu0 %221
      %223 = vrot.lane.b32.xlu0 %v181, 111
      %v224 = vpop.permute.xlu0 %223
      %225 = vrot.lane.b32.xlu0 %v188, 111
      %v226 = vpop.permute.xlu0 %225
      %vm227 = vcmask 908288
      %v228 = vsel %vm227, %v220, %v222
      %v229 = vsel %vm227, %v222, %v224
      %v230 = vsel %vm227, %v224, %v226
      %234 = vrot.lane.b32.xlu0 %v173, 110
      %v235 = vpop.permute.xlu0 %234
      %236 = vrot.lane.b32.xlu0 %v177, 110
      %v237 = vpop.permute.xlu0 %236
      %238 = vrot.lane.b32.xlu0 %v181, 110
      %v239 = vpop.permute.xlu0 %238
      %240 = vrot.lane.b32.xlu0 %v188, 110
      %v241 = vpop.permute.xlu0 %240
      %vm242 = vcmask 900096
      %v243 = vsel %vm242, %v235, %v237
      %v244 = vsel %vm242, %v237, %v239
      %v245 = vsel %vm242, %v239, %v241
      %249 = vrot.lane.b32.xlu0 %v173, 109
      %v250 = vpop.permute.xlu0 %249
      %251 = vrot.lane.b32.xlu0 %v177, 109
      %v252 = vpop.permute.xlu0 %251
      %253 = vrot.lane.b32.xlu0 %v181, 109
      %v254 = vpop.permute.xlu0 %253
      %255 = vrot.lane.b32.xlu0 %v188, 109
      %v256 = vpop.permute.xlu0 %255
      %vm257 = vcmask 891904
      %v258 = vsel %vm257, %v250, %v252
      %v259 = vsel %vm257, %v252, %v254
      %v260 = vsel %vm257, %v254, %v256
      %264 = vrot.lane.b32.xlu0 %v173, 94
      %v265 = vpop.permute.xlu0 %264
      %266 = vrot.lane.b32.xlu0 %v177, 94
      %v267 = vpop.permute.xlu0 %266
      %268 = vrot.lane.b32.xlu0 %v181, 94
      %v269 = vpop.permute.xlu0 %268
      %270 = vrot.lane.b32.xlu0 %v188, 94
      %v271 = vpop.permute.xlu0 %270
      %vm272 = vcmask 769024
      %v273 = vsel %vm272, %v265, %v267
      %v274 = vsel %vm272, %v267, %v269
      %v275 = vsel %vm272, %v269, %v271
      %279 = vrot.lane.b32.xlu0 %v173, 93
      %v280 = vpop.permute.xlu0 %279
      %281 = vrot.lane.b32.xlu0 %v177, 93
      %v282 = vpop.permute.xlu0 %281
      %283 = vrot.lane.b32.xlu0 %v181, 93
      %v284 = vpop.permute.xlu0 %283
      %285 = vrot.lane.b32.xlu0 %v188, 93
      %v286 = vpop.permute.xlu0 %285
      %vm287 = vcmask 760832
      %v288 = vsel %vm287, %v280, %v282
      %v289 = vsel %vm287, %v282, %v284
      %v290 = vsel %vm287, %v284, %v286
      %294 = vrot.lane.b32.xlu0 %v173, 92
      %v295 = vpop.permute.xlu0 %294
      %296 = vrot.lane.b32.xlu0 %v177, 92
      %v297 = vpop.permute.xlu0 %296
      %298 = vrot.lane.b32.xlu0 %v181, 92
      %v299 = vpop.permute.xlu0 %298
      %300 = vrot.lane.b32.xlu0 %v188, 92
      %v301 = vpop.permute.xlu0 %300
      %vm302 = vcmask 752640
      %v303 = vsel %vm302, %v295, %v297
      %v304 = vsel %vm302, %v297, %v299
      %v305 = vsel %vm302, %v299, %v301
      %vm309 = vcmask 1040384
      %v310 = vsel %vm309, %v173, %v198
      %v311 = vsel %vm309, %v177, %v199
      %v312 = vsel %vm309, %v181, %v200
      %vm313 = vcmask 1041408
      %v314 = vsel %vm313, %v310, %v213
      %v315 = vsel %vm313, %v311, %v214
      %v316 = vsel %vm313, %v312, %v215
      %vm317 = vcmask 1042432
      %v318 = vsel %vm317, %v314, %v228
      %v319 = vsel %vm317, %v315, %v229
      %v320 = vsel %vm317, %v316, %v230
      %vm321 = vcmask 1043456
      %v322 = vsel %vm321, %v318, %v243
      %v323 = vsel %vm321, %v319, %v244
      %v324 = vsel %vm321, %v320, %v245
      %vm325 = vcmask 1044480
      %v326 = vsel %vm325, %v322, %v258
      %v327 = vsel %vm325, %v323, %v259
      %v328 = vsel %vm325, %v324, %v260
      %vm329 = vcmask 1045504
      %v330 = vsel %vm329, %v326, %v273
      %v331 = vsel %vm329, %v327, %v274
      %v332 = vsel %vm329, %v328, %v275
      %vm333 = vcmask 1046528
      %v334 = vsel %vm333, %v330, %v288
      %v335 = vsel %vm333, %v331, %v289
      %v336 = vsel %vm333, %v332, %v290
      %v337 = vsel %vm309, %v303, %v243
      %v338 = vsel %vm309, %v304, %v244
      %v339 = vsel %vm309, %v305, %v245
      %v340 = vsel %vm313, %v337, %v243
      %v341 = vsel %vm313, %v338, %v244
      %v342 = vsel %vm313, %v339, %v245
      %v343 = vsel %vm317, %v340, %v243
      %v344 = vsel %vm317, %v341, %v244
      %v345 = vsel %vm317, %v342, %v245
      %v346 = vsel %vm321, %v343, %v243
      %v347 = vsel %vm321, %v344, %v244
      %v348 = vsel %vm321, %v345, %v245
      %v349 = vsel %vm325, %v346, %v243
      %v350 = vsel %vm325, %v347, %v244
      %v351 = vsel %vm325, %v348, %v245
      %v352 = vsel %vm329, %v349, %v243
      %v353 = vsel %vm329, %v350, %v244
      %v354 = vsel %vm329, %v351, %v245
      %v355 = vsel %vm333, %v352, %v243
      %v356 = vsel %vm333, %v353, %v244
      %v357 = vsel %vm333, %v354, %v245
      %v358 = vld [vmem:[%s1] sm:$0xff]
      %v359 = vld [vmem:[%s1 + $0x8] sm:$0xff]
      %v360 = vld [vmem:[%s1 + $0x10] sm:$0xf]
      %v361 = vld [vmem:[%s2] sm:$0xff]
      %v362 = vld [vmem:[%s2 + $0x8] sm:$0xff]
      %v363 = vld [vmem:[%s2 + $0x10] sm:$0xf]
      %365 = vset.pattern.permute.xlu0 0
      %366 = vperm.xlu0 %365, %v361
      %v367 = vpop.permute.xlu0 %366
      %370 = vset.pattern.permute.xlu0 0
      %371 = vperm.xlu0 %370, %v362
      %v372 = vpop.permute.xlu0 %371
      %375 = vset.pattern.permute.xlu0 0
      %376 = vperm.xlu0 %375, %v363
      %v377 = vpop.permute.xlu0 %376
      %vm379 = vcmask 130048
      %v381 = vsel %vm379, %v358, 0
      %v384 = vsel %vm379, %v359, 0
      %v387 = vsel %vm379, %v360, 0
      %389 = vmatprep.subr.mxu0 0.0
      %390 = vmatpush1.msra.mxu0 0.0
      %391 = vmatprep.subr.mxu0 0.0
      %392 = vmatpush1.msra.mxu0 0.0
      %393 = vmatprep.subr.mxu0 0.0
      %394 = vmatpush1.msra.mxu0 0.0
      %395 = vmatprep.subr.mxu0 0.0
      %396 = vmatpush1.msra.mxu0 0.0
      %397 = vmatprep.subr.mxu0 0.0
      %398 = vmatpush1.msra.mxu0 0.0
      %399 = vmatprep.subr.mxu0 0.0
      %400 = vmatpush1.msra.mxu0 0.0
      %401 = vmatprep.subr.mxu0 0.0
      %402 = vmatpush1.msra.mxu0 0.0
      %403 = vmatprep.subr.mxu0 0.0
      %404 = vmatpush1.msra.mxu0 0.0
      %405 = vmatprep.subr.mxu0 0.0
      %406 = vmatpush1.msra.mxu0 0.0
      %407 = vmatprep.subr.mxu0 0.0
      %408 = vmatpush1.msra.mxu0 0.0
      %409 = vmatprep.subr.mxu0 0.0
      %410 = vmatpush1.msra.mxu0 0.0
      %411 = vmatprep.subr.mxu0 0.0
      %412 = vmatpush1.msra.mxu0 0.0
      %413 = vmatprep.subr.mxu0 0.0
      %414 = vmatpush1.msra.mxu0 0.0
      %415 = vmatprep.subr.mxu0 0.0
      %416 = vmatpush1.msra.mxu0 0.0
      %417 = vmatprep.subr.mxu0 %v356
      %418 = vmatpush1.msra.mxu0 %v355
      %419 = vmatprep.subr.mxu0 %v335
      %420 = vmatpush1.msra.mxu0 %v334
      %421 = vmatprep.subr.mxu0 0.0
      %422 = vmatpush2.msra.mxu0 0.0
      %423 = vmatprep.subr.mxu0 0.0
      %424 = vmatpush2.msra.mxu0 0.0
      %425 = vmatprep.subr.mxu0 0.0
      %426 = vmatpush2.msra.mxu0 0.0
      %427 = vmatprep.subr.mxu0 0.0
      %428 = vmatpush2.msra.mxu0 0.0
      %429 = vmatprep.subr.mxu0 0.0
      %430 = vmatpush2.msra.mxu0 0.0
      %431 = vmatprep.subr.mxu0 0.0
      %432 = vmatpush2.msra.mxu0 0.0
      %433 = vmatprep.subr.mxu0 0.0
      %434 = vmatpush2.msra.mxu0 0.0
      %435 = vmatprep.subr.mxu0 0.0
      %436 = vmatpush2.msra.mxu0 0.0
      %437 = vmatprep.subr.mxu0 0.0
      %438 = vmatpush2.msra.mxu0 0.0
      %439 = vmatprep.subr.mxu0 0.0
      %440 = vmatpush2.msra.mxu0 0.0
      %441 = vmatprep.subr.mxu0 0.0
      %442 = vmatpush2.msra.mxu0 0.0
      %443 = vmatprep.subr.mxu0 0.0
      %444 = vmatpush2.msra.mxu0 0.0
      %445 = vmatprep.subr.mxu0 0.0
      %446 = vmatpush2.msra.mxu0 0.0
      %447 = vmatprep.subr.mxu0 0.0
      %448 = vmatpush2.msra.mxu0 0.0
      %449 = vmatprep.subr.mxu0 0.0
      %450 = vmatpush2.msra.mxu0 0.0
      %451 = vmatprep.subr.mxu0 0.0
      %452 = vmatpush2.msra.mxu0 0.0
      %453 = vmatprep.mubr.f32.mxu0 0.0
      %454 = vmatmul.mubr.f32.gmra.mxu0 %v381
      %v455 = vpop.f32.mrf.mxu0
      %v456 = vadd.f32 %v367, %v455
      %v457 = vpop.f32.mrf.mxu0
      %v458 = vadd.f32 %v367, %v457
      %459 = vmatprep.mubr.f32.mxu0 0.0
      %460 = vmatmul.mubr.f32.gmra.mxu0 %v384
      %v461 = vpop.f32.mrf.mxu0
      %v462 = vadd.f32 %v372, %v461
      %v463 = vpop.f32.mrf.mxu0
      %v464 = vadd.f32 %v372, %v463
      %465 = vmatprep.mubr.f32.mxu0 0.0
      %466 = vmatmul.mubr.f32.gmra.mxu0 %v387
      %v467 = vpop.f32.mrf.mxu0
      %v468 = vadd.f32 %v377, %v467
      %v469 = vpop.f32.mrf.mxu0
      %v470 = vadd.f32 %v377, %v469
      %471 = vdwg.mxu0
      %472 = vmatprep.subr.mxu0 0.0
      %473 = vmatpush1.msra.mxu0 0.0
      %474 = vmatprep.subr.mxu0 0.0
      %475 = vmatpush1.msra.mxu0 0.0
      %476 = vmatprep.subr.mxu0 0.0
      %477 = vmatpush1.msra.mxu0 0.0
      %478 = vmatprep.subr.mxu0 0.0
      %479 = vmatpush1.msra.mxu0 0.0
      %480 = vmatprep.subr.mxu0 0.0
      %481 = vmatpush1.msra.mxu0 0.0
      %482 = vmatprep.subr.mxu0 0.0
      %483 = vmatpush1.msra.mxu0 0.0
      %484 = vmatprep.subr.mxu0 0.0
      %485 = vmatpush1.msra.mxu0 0.0
      %486 = vmatprep.subr.mxu0 0.0
      %487 = vmatpush1.msra.mxu0 0.0
      %488 = vmatprep.subr.mxu0 0.0
      %489 = vmatpush1.msra.mxu0 0.0
      %490 = vmatprep.subr.mxu0 0.0
      %491 = vmatpush1.msra.mxu0 0.0
      %492 = vmatprep.subr.mxu0 0.0
      %493 = vmatpush1.msra.mxu0 0.0
      %494 = vmatprep.subr.mxu0 0.0
      %495 = vmatpush1.msra.mxu0 0.0
      %496 = vmatprep.subr.mxu0 0.0
      %497 = vmatpush1.msra.mxu0 0.0
      %498 = vmatprep.subr.mxu0 0.0
      %499 = vmatpush1.msra.mxu0 0.0
      %500 = vmatprep.subr.mxu0 0.0
      %501 = vmatpush1.msra.mxu0 %v357
      %502 = vmatprep.subr.mxu0 0.0
      %503 = vmatpush1.msra.mxu0 %v336
      %504 = vmatprep.subr.mxu0 0.0
      %505 = vmatpush2.msra.mxu0 0.0
      %506 = vmatprep.subr.mxu0 0.0
      %507 = vmatpush2.msra.mxu0 0.0
      %508 = vmatprep.subr.mxu0 0.0
      %509 = vmatpush2.msra.mxu0 0.0
      %510 = vmatprep.subr.mxu0 0.0
      %511 = vmatpush2.msra.mxu0 0.0
      %512 = vmatprep.subr.mxu0 0.0
      %513 = vmatpush2.msra.mxu0 0.0
      %514 = vmatprep.subr.mxu0 0.0
      %515 = vmatpush2.msra.mxu0 0.0
      %516 = vmatprep.subr.mxu0 0.0
      %517 = vmatpush2.msra.mxu0 0.0
      %518 = vmatprep.subr.mxu0 0.0
      %519 = vmatpush2.msra.mxu0 0.0
      %520 = vmatprep.subr.mxu0 0.0
      %521 = vmatpush2.msra.mxu0 0.0
      %522 = vmatprep.subr.mxu0 0.0
      %523 = vmatpush2.msra.mxu0 0.0
      %524 = vmatprep.subr.mxu0 0.0
      %525 = vmatpush2.msra.mxu0 0.0
      %526 = vmatprep.subr.mxu0 0.0
      %527 = vmatpush2.msra.mxu0 0.0
      %528 = vmatprep.subr.mxu0 0.0
      %529 = vmatpush2.msra.mxu0 0.0
      %530 = vmatprep.subr.mxu0 0.0
      %531 = vmatpush2.msra.mxu0 0.0
      %532 = vmatprep.subr.mxu0 0.0
      %533 = vmatpush2.msra.mxu0 0.0
      %534 = vmatprep.subr.mxu0 0.0
      %535 = vmatpush2.msra.mxu0 0.0
      %536 = vmatprep.mubr.f32.mxu0 0.0
      %537 = vmatmul.mubr.f32.gmra.mxu0 %v381
      %v538 = vpop.f32.mrf.mxu0
      %v539 = vadd.f32 %v367, %v538
      %v540 = vpop.f32.mrf.mxu0
      %541 = vmatprep.mubr.f32.mxu0 0.0
      %542 = vmatmul.mubr.f32.gmra.mxu0 %v384
      %v543 = vpop.f32.mrf.mxu0
      %v544 = vadd.f32 %v372, %v543
      %v545 = vpop.f32.mrf.mxu0
      %546 = vmatprep.mubr.f32.mxu0 0.0
      %547 = vmatmul.mubr.f32.gmra.mxu0 %v387
      %v548 = vpop.f32.mrf.mxu0
      %v549 = vadd.f32 %v377, %v548
      %v550 = vpop.f32.mrf.mxu0
      %551 = vdwg.mxu0
      %v552 = vmax.f32 %v456, 0.0
      %v553 = vmax.f32 %v458, 0.0
      %v554 = vmax.f32 %v539, 0.0
      %v555 = vmax.f32 %v462, 0.0
      %v556 = vmax.f32 %v464, 0.0
      %v557 = vmax.f32 %v544, 0.0
      %v558 = vmax.f32 %v468, 0.0
      %v559 = vmax.f32 %v470, 0.0
      %v560 = vmax.f32 %v549, 0.0
      %v561 = vadd.f32 %v552, %v243
      %v562 = vadd.f32 %v553, %v244
      %v563 = vadd.f32 %v554, %v245
      %v564 = vadd.f32 %v555, %v243
      %v565 = vadd.f32 %v556, %v244
      %v566 = vadd.f32 %v557, %v245
      %v567 = vadd.f32 %v558, %v243
      %v568 = vadd.f32 %v559, %v244
      %v569 = vadd.f32 %v560, %v245
      %570 = vst [vmem:[%s167] sm:$0xff] %v561
      %571 = vst [vmem:[%s167 + $0x8] sm:$0xff] %v562
      %572 = vst [vmem:[%s167 + $0x10] sm:$0xff] %v563
      %573 = vst [vmem:[%s167 + $0x18] sm:$0xff] %v564
      %574 = vst [vmem:[%s167 + $0x20] sm:$0xff] %v565
      %575 = vst [vmem:[%s167 + $0x28] sm:$0xff] %v566
      %576 = vst [vmem:[%s167 + $0x30] sm:$0xf] %v567
      %577 = vst [vmem:[%s167 + $0x38] sm:$0xf] %v568
      %578 = vst [vmem:[%s167 + $0x40] sm:$0xf] %v569
      %p579 = scmp.lt.s32.totalorder %s14, 1
      %s580 = scalar_select %p579, %s14, 1
      %s581 = smul.addr %s580, 9
      %s582 = smul.addr %s581, 8
      %s583 = scalar_lea.vmem %s3, %s582
      // Predicated region
      $region33: #{tpu_custom_call.1} parent=31 // pred_check
        %p584 = pneg %p100
      $region34: #{tpu_custom_call.1} parent=31 // pred_check_branch
        %586 = sbr.rel (%p584) target = $region36
      $region35: #{tpu_custom_call.1} parent=31 // pred_region
        _
      $region36: #{tpu_custom_call.1} parent=31 // pred_fallthru
        _
    $region32: #{tpu_custom_call.1} parent=5 // pred_fallthru
      _
    %p587 = scmp.le.s32.totalorder 2, %s9
    // Predicated region
    $region37: #{tpu_custom_call.1} parent=5 // pred_check
      %p588 = pneg %p587
    $region38: #{tpu_custom_call.1} parent=5 // pred_check_branch
      %590 = sbr.rel (%p588) target = $region40
    $region39: #{tpu_custom_call.1} parent=5 // pred_region
      %s591 = ssub.s32 %s9, 2
      // Predicated region
      $region41: #{tpu_custom_call.1} parent=39 // pred_check
        %p592 = pneg %p106
      $region42: #{tpu_custom_call.1} parent=39 // pred_check_branch
        %594 = sbr.rel (%p592) target = $region44
      $region43: #{tpu_custom_call.1} parent=39 // pred_region
        %p595 = scmp.lt.s32.totalorder %s15, 1
        %s596 = scalar_select %p595, %s15, 1
        %s597 = smul.addr %s596, 9
        %s598 = smul.addr %s597, 8
        %s599 = scalar_lea.vmem %s3, %s598
      $region44: #{tpu_custom_call.1} parent=39 // pred_fallthru
        _
    $region40: #{tpu_custom_call.1} parent=5 // pred_fallthru
      _
  $region6: #{tpu_custom_call.1} parent=0 // loop_footer
    %s13 = sadd.s32 1, %s9
  $region7: #{tpu_custom_call.1} parent=0 // loop_footer_branch
    %8 = sbr.rel target = $region3
  $region8: #{tpu_custom_call.1} parent=0 // loop_exit
    _

</llo_original>
